<compile_context>
chip_gen: v5e
topology: v5e:2x2
jax: 0.10.0
libtpu: 0.0.40
codegen_flags: <defaults>
</compile_context>

<pallas_src>
import functools

import jax
import jax.numpy as jnp
from jax.experimental import pallas as pl
from jax.experimental.pallas import tpu as pltpu

LANE = 128      # vreg lane width (last dim)
SUBLANE = 8     # f32 sublane count (second-to-last dim)


def _round_up(n, m):
    return ((n + m - 1) // m) * m


def _fused_mlp_kernel(x_ref, w_ref, b_ref, o_ref, *, num_layers):
    """x_ref: (TM, Fp); w_ref: (L, Fp, Fp); b_ref: (L, 1, Fp); o_ref: (TM, Fp)."""
    h = x_ref[...]
    for l in range(num_layers):              # static unroll; L is small
        acc = jnp.dot(h, w_ref[l], preferred_element_type=jnp.float32)
        acc = acc + b_ref[l]                 # bias folded onto f32 accumulator
        if l < num_layers - 1:
            acc = jnp.maximum(acc, 0.0)      # ReLU (VPU)
        h = acc
    o_ref[...] = h.astype(o_ref.dtype)


def pack_params(params):
    """Zero-pad every layer's (W, b) to (Fp, Fp)/(1, Fp) and stack along a layer axis."""
    widths = [params[0][0].shape[0]] + [w.shape[1] for w, _ in params]
    f_pad = _round_up(max(widths), LANE)
    w_list, b_list = [], []
    for w, b in params:
        w_list.append(jnp.pad(
            w.astype(jnp.float32),
            ((0, f_pad - w.shape[0]), (0, f_pad - w.shape[1]))))
        b_list.append(jnp.pad(
            b.reshape(1, -1).astype(jnp.float32),
            ((0, 0), (0, f_pad - b.shape[-1]))))
    return jnp.stack(w_list), jnp.stack(b_list), f_pad


def neural_network_forward(x, params, *, tile_m=256):
    """Matches NeuralNetwork.forward: (Linear+ReLU) x hidden_layers, then Linear."""
    batch, d_in = x.shape
    d_out = params[-1][0].shape[1]
    n_layers = len(params)
    w_stack, b_stack, f_pad = pack_params(params)

    kernel = functools.partial(_fused_mlp_kernel, num_layers=n_layers)
    vmem = pltpu.MemorySpace.VMEM

    if batch <= tile_m:
        # Single tile: grid-free call, whole (padded) arrays resident in VMEM.
        b_pad = _round_up(max(batch, SUBLANE), SUBLANE)
        x_pad = jnp.pad(x.astype(jnp.float32),
                        ((0, b_pad - batch), (0, f_pad - d_in)))
        out_pad = pl.pallas_call(
            kernel,
            out_shape=jax.ShapeDtypeStruct((b_pad, f_pad), jnp.float32),
            in_specs=[
                pl.BlockSpec(memory_space=vmem),
                pl.BlockSpec(memory_space=vmem),
                pl.BlockSpec(memory_space=vmem),
            ],
            out_specs=pl.BlockSpec(memory_space=vmem),
        )(x_pad, w_stack, b_stack)
    else:
        # Batch-tiled path: grid over the batch axis, marked "parallel" so it
        # shards across TensorCores (2/chip on v7x). Constant index_maps keep
        # the weight/bias stacks VMEM-resident across grid steps.
        b_pad = _round_up(batch, tile_m)
        x_pad = jnp.pad(x.astype(jnp.float32),
                        ((0, b_pad - batch), (0, f_pad - d_in)))
        out_pad = pl.pallas_call(
            kernel,
            out_shape=jax.ShapeDtypeStruct((b_pad, f_pad), jnp.float32),
            grid=(b_pad // tile_m,),
            in_specs=[
                pl.BlockSpec((tile_m, f_pad), lambda i: (i, 0)),
                pl.BlockSpec((n_layers, f_pad, f_pad), lambda i: (0, 0, 0)),
                pl.BlockSpec((n_layers, 1, f_pad), lambda i: (0, 0, 0)),
            ],
            out_specs=pl.BlockSpec((tile_m, f_pad), lambda i: (i, 0)),
            compiler_params=pltpu.CompilerParams(
                dimension_semantics=("parallel",)
            ),
        )(x_pad, w_stack, b_stack)

    return out_pad[:batch, :d_out]


def init_mlp_params(key, input_dim, output_dim, hidden_size, hidden_layers):
    """Deterministic init mimicking nn.Linear's U(-1/sqrt(fan_in), 1/sqrt(fan_in)).

    Layer widths match the PyTorch module: Linear(in,h)+ReLU, (hidden_layers-1)
    x [Linear(h,h)+ReLU], Linear(h,out) -> hidden_layers+1 Linear layers.
    Weights stored as (in_features, out_features) = nn.Linear.weight.T.
    """
    dims = [input_dim] + [hidden_size] * hidden_layers + [output_dim]
    params = []
    for i in range(len(dims) - 1):
        fan_in, fan_out = dims[i], dims[i + 1]
        key, kw, kb = jax.random.split(key, 3)
        bound = 1.0 / jnp.sqrt(jnp.asarray(fan_in, jnp.float32))
        w = jax.random.uniform(kw, (fan_in, fan_out), jnp.float32, -bound, bound)
        b = jax.random.uniform(kb, (1, fan_out), jnp.float32, -bound, bound)
        params.append((w, b))
    return params


def _reference(x, params):
    h = x
    for i, (w, b) in enumerate(params):
        h = h @ w + b
        if i < len(params) - 1:
            h = jnp.maximum(h, 0.0)
    return h


if __name__ == "__main__":
    input_dim, output_dim = 16, 8
    hidden_size, hidden_layers = 32, 3
    batch = 8

    key = jax.random.PRNGKey(0)
    key, kx = jax.random.split(key)
    x = jax.random.normal(kx, (batch, input_dim), jnp.float32)
    params = init_mlp_params(key, input_dim, output_dim, hidden_size, hidden_layers)

    # Small batch: grid-free fused kernel.
    out = jax.block_until_ready(neural_network_forward(x, params))
    ref = _reference(x, params)
    assert out.shape == (batch, output_dim)
    assert jnp.allclose(out, ref, atol=1e-5, rtol=1e-5)

    # Large batch: exercises the batch-tiled "parallel" grid path.
    key, kx2 = jax.random.split(key)
    x_big = jax.random.normal(kx2, (512, input_dim), jnp.float32)
    out_big = jax.block_until_ready(
        neural_network_forward(x_big, params, tile_m=256))
    ref_big = _reference(x_big, params)
    assert out_big.shape == (512, output_dim)
    assert jnp.allclose(out_big, ref_big, atol=1e-5, rtol=1e-5)

    print("KERNEL_OK")
</pallas_src>

<mosaic_0001>
module attributes {stable_mosaic.version = 11 : i64} {
  func.func @_fused_mlp_kernel(%arg0: memref<8x128xf32, #tpu.memory_space<vmem>>, %arg1: memref<4x128x128xf32, #tpu.memory_space<vmem>>, %arg2: memref<4x1x128xf32, #tpu.memory_space<vmem>>, %arg3: memref<8x128xf32, #tpu.memory_space<vmem>>) attributes {dimension_semantics = [], scalar_prefetch = 0 : i64, scratch_operands = 0 : i64, tpu.core_type = #tpu.core_type<tc>} {
    %c0 = arith.constant 0 : index
    %c0_0 = arith.constant 0 : index
    %0 = vector.load %arg0[%c0, %c0_0] : memref<8x128xf32, #tpu.memory_space<vmem>>, vector<8x128xf32>
    %c0_1 = arith.constant 0 : index
    %c0_2 = arith.constant 0 : index
    %c0_3 = arith.constant 0 : index
    %1 = vector.load %arg1[%c0_1, %c0_2, %c0_3] : memref<4x128x128xf32, #tpu.memory_space<vmem>>, vector<1x128x128xf32>
    %2 = vector.shape_cast %1 : vector<1x128x128xf32> to vector<128x128xf32>
    %cst = arith.constant dense<0.000000e+00> : vector<8x128xf32>
    %3 = tpu.matmul %0, %2, %cst {dimension_numbers = #tpu.dot_dimension_numbers<[1], [0], [0], [1], [0, 0, 1, 1], [], []>} : vector<8x128xf32>, vector<128x128xf32>, vector<8x128xf32> -> vector<8x128xf32>
    %c0_4 = arith.constant 0 : index
    %c0_5 = arith.constant 0 : index
    %c0_6 = arith.constant 0 : index
    %4 = vector.load %arg2[%c0_4, %c0_5, %c0_6] : memref<4x1x128xf32, #tpu.memory_space<vmem>>, vector<1x1x128xf32>
    %5 = vector.shape_cast %4 : vector<1x1x128xf32> to vector<1x128xf32>
    %6 = vector.broadcast %5 : vector<1x128xf32> to vector<8x128xf32>
    %7 = arith.addf %3, %6 : vector<8x128xf32>
    %cst_7 = arith.constant 0.000000e+00 : f32
    %8 = vector.broadcast %cst_7 : f32 to vector<8x128xf32>
    %9 = arith.maximumf %7, %8 : vector<8x128xf32>
    %c1 = arith.constant 1 : index
    %c0_8 = arith.constant 0 : index
    %c0_9 = arith.constant 0 : index
    %10 = vector.load %arg1[%c1, %c0_8, %c0_9] : memref<4x128x128xf32, #tpu.memory_space<vmem>>, vector<1x128x128xf32>
    %11 = vector.shape_cast %10 : vector<1x128x128xf32> to vector<128x128xf32>
    %cst_10 = arith.constant dense<0.000000e+00> : vector<8x128xf32>
    %12 = tpu.matmul %9, %11, %cst_10 {dimension_numbers = #tpu.dot_dimension_numbers<[1], [0], [0], [1], [0, 0, 1, 1], [], []>} : vector<8x128xf32>, vector<128x128xf32>, vector<8x128xf32> -> vector<8x128xf32>
    %c1_11 = arith.constant 1 : index
    %c0_12 = arith.constant 0 : index
    %c0_13 = arith.constant 0 : index
    %13 = vector.load %arg2[%c1_11, %c0_12, %c0_13] : memref<4x1x128xf32, #tpu.memory_space<vmem>>, vector<1x1x128xf32>
    %14 = vector.shape_cast %13 : vector<1x1x128xf32> to vector<1x128xf32>
    %15 = vector.broadcast %14 : vector<1x128xf32> to vector<8x128xf32>
    %16 = arith.addf %12, %15 : vector<8x128xf32>
    %cst_14 = arith.constant 0.000000e+00 : f32
    %17 = vector.broadcast %cst_14 : f32 to vector<8x128xf32>
    %18 = arith.maximumf %16, %17 : vector<8x128xf32>
    %c2 = arith.constant 2 : index
    %c0_15 = arith.constant 0 : index
    %c0_16 = arith.constant 0 : index
    %19 = vector.load %arg1[%c2, %c0_15, %c0_16] : memref<4x128x128xf32, #tpu.memory_space<vmem>>, vector<1x128x128xf32>
    %20 = vector.shape_cast %19 : vector<1x128x128xf32> to vector<128x128xf32>
    %cst_17 = arith.constant dense<0.000000e+00> : vector<8x128xf32>
    %21 = tpu.matmul %18, %20, %cst_17 {dimension_numbers = #tpu.dot_dimension_numbers<[1], [0], [0], [1], [0, 0, 1, 1], [], []>} : vector<8x128xf32>, vector<128x128xf32>, vector<8x128xf32> -> vector<8x128xf32>
    %c2_18 = arith.constant 2 : index
    %c0_19 = arith.constant 0 : index
    %c0_20 = arith.constant 0 : index
    %22 = vector.load %arg2[%c2_18, %c0_19, %c0_20] : memref<4x1x128xf32, #tpu.memory_space<vmem>>, vector<1x1x128xf32>
    %23 = vector.shape_cast %22 : vector<1x1x128xf32> to vector<1x128xf32>
    %24 = vector.broadcast %23 : vector<1x128xf32> to vector<8x128xf32>
    %25 = arith.addf %21, %24 : vector<8x128xf32>
    %cst_21 = arith.constant 0.000000e+00 : f32
    %26 = vector.broadcast %cst_21 : f32 to vector<8x128xf32>
    %27 = arith.maximumf %25, %26 : vector<8x128xf32>
    %c3 = arith.constant 3 : index
    %c0_22 = arith.constant 0 : index
    %c0_23 = arith.constant 0 : index
    %28 = vector.load %arg1[%c3, %c0_22, %c0_23] : memref<4x128x128xf32, #tpu.memory_space<vmem>>, vector<1x128x128xf32>
    %29 = vector.shape_cast %28 : vector<1x128x128xf32> to vector<128x128xf32>
    %cst_24 = arith.constant dense<0.000000e+00> : vector<8x128xf32>
    %30 = tpu.matmul %27, %29, %cst_24 {dimension_numbers = #tpu.dot_dimension_numbers<[1], [0], [0], [1], [0, 0, 1, 1], [], []>} : vector<8x128xf32>, vector<128x128xf32>, vector<8x128xf32> -> vector<8x128xf32>
    %c3_25 = arith.constant 3 : index
    %c0_26 = arith.constant 0 : index
    %c0_27 = arith.constant 0 : index
    %31 = vector.load %arg2[%c3_25, %c0_26, %c0_27] : memref<4x1x128xf32, #tpu.memory_space<vmem>>, vector<1x1x128xf32>
    %32 = vector.shape_cast %31 : vector<1x1x128xf32> to vector<1x128xf32>
    %33 = vector.broadcast %32 : vector<1x128xf32> to vector<8x128xf32>
    %34 = arith.addf %30, %33 : vector<8x128xf32>
    %c0_28 = arith.constant 0 : index
    %c0_29 = arith.constant 0 : index
    %35 = vector.load %arg3[%c0_28, %c0_29] : memref<8x128xf32, #tpu.memory_space<vmem>>, vector<8x128xf32>
    tpu.vector_store %arg3[%c0_28, %c0_29], %34 {strides = array<i32>} : memref<8x128xf32, #tpu.memory_space<vmem>>, vector<8x128xf32>,
    return
  }
}

</mosaic_0001>

<llo_original>
// kernel: tpu_custom_call.1
$region0: #{tpu_custom_call.1}
  #allocation0 [shape = 'u32[]', space=smem, size = 0x4, offset = 0x4, fixed_abs, tag = 'smem constant byte address 0x4 - core index']
  #allocation1 [shape = 'u32[72,128]{1,0:T(1,128)}', space=vmem, size = 0x9000, scoped, tag = 'internal scratch']
  %s0 = inlined_call_operand.hbm [shape: f32[8,128], index: 0, kind: input, shape index: {}]
  %s1 = inlined_call_operand.hbm [shape: f32[4,128,128], index: 1, kind: input, shape index: {}]
  %s2 = inlined_call_operand.hbm [shape: f32[4,1,128], index: 2, kind: input, shape index: {}]
  %s3 = inlined_call_operand.hbm [shape: f32[8,128], index: 3, kind: output, shape index: {}]
  %s4 = sld [smem:[#allocation0]]
  $region34: #{tpu_custom_call.1} parent=0
    _
  %s6 = ssub.s32 1, %s4
  %s7 = scalar_select 0, %s6, %s4
  $region1: #{tpu_custom_call.1} parent=0
    #allocation2 [shape = 'u8[4096]{0}', space=vmem, size = 0x1000, scoped, tag = 'input window, operand 0, single buffered']
    #allocation3 [shape = 's32[1]{0}', space=sflag, size = 0x4, scoped, tag = 'scoped memory for tpu_custom_call.1']
    #allocation4 [shape = 's32[1]{0}', space=sflag, size = 0x4, scoped, tag = 'scoped memory for tpu_custom_call.1']
    #allocation5 [shape = 'u8[262144]{0}', space=vmem, size = 0x40000, scoped, tag = 'input window, operand 1, single buffered']
    #allocation6 [shape = 's32[1]{0}', space=sflag, size = 0x4, scoped, tag = 'scoped memory for tpu_custom_call.1']
    #allocation7 [shape = 'u8[2048]{0}', space=vmem, size = 0x800, scoped, tag = 'input window, operand 2, single buffered']
    #allocation8 [shape = 'u8[4096]{0}', space=vmem, size = 0x1000, scoped, tag = 'output window, operand 0, single buffered']
    %8 = vsyncpa [#allocation3], 0
    %9 = vsyncpa [#allocation6], 0
    %10 = vsyncpa [#allocation4], 0
    // Predicated region
    $region2: #{tpu_custom_call.1} parent=1 // pred_check
      _
    $region3: #{tpu_custom_call.1} parent=1 // pred_check_branch
      %12 = sbr.rel (0) target = $region5
    $region4: #{tpu_custom_call.1} parent=1 // pred_region
      %14 = vsyncadd [#allocation3], 0
      %s16 = sshll.u32 %s0, 4
      %s17 = int_to_ptr.hbm [resolvable:$true] %s16
      %s18 = sshll.u32 [#allocation2], 4
      %s19 = int_to_ptr.vmem [resolvable:$true] %s18
      %21 = dma.hbm_to_vmem [thread:$0]  %s17, 128, %s19, [#allocation3]
    $region5: #{tpu_custom_call.1} parent=1 // pred_fallthru
      _
    // Predicated region
    $region6: #{tpu_custom_call.1} parent=1 // pred_check
      _
    $region7: #{tpu_custom_call.1} parent=1 // pred_check_branch
      %23 = sbr.rel (0) target = $region9
    $region8: #{tpu_custom_call.1} parent=1 // pred_region
      %25 = vsyncadd [#allocation6], 0
      %s26 = sshll.u32 %s1, 4
      %s27 = int_to_ptr.hbm [resolvable:$true] %s26
      %s28 = sshll.u32 [#allocation5], 4
      %s29 = int_to_ptr.vmem [resolvable:$true] %s28
      %34 = dma.hbm_to_vmem [thread:$0]  %s27, 8192, %s29, [#allocation6], 128, 128, 8
    $region9: #{tpu_custom_call.1} parent=1 // pred_fallthru
      _
    // Predicated region
    $region10: #{tpu_custom_call.1} parent=1 // pred_check
      _
    $region11: #{tpu_custom_call.1} parent=1 // pred_check_branch
      %36 = sbr.rel (0) target = $region13
    $region12: #{tpu_custom_call.1} parent=1 // pred_region
      %38 = vsyncadd [#allocation6], 0
      %s39 = sshll.u32 %s2, 4
      %s40 = int_to_ptr.hbm [resolvable:$true] %s39
      %s41 = sshll.u32 [#allocation7], 4
      %s42 = int_to_ptr.vmem [resolvable:$true] %s41
      %47 = dma.hbm_to_vmem [thread:$0]  %s40, 64, %s42, [#allocation6], 16, 16, 1
    $region13: #{tpu_custom_call.1} parent=1 // pred_fallthru
      _
    // Predicated region
    $region14: #{tpu_custom_call.1} parent=1 // pred_check
      _
    $region15: #{tpu_custom_call.1} parent=1 // pred_check_branch
      %49 = sbr.rel (0) target = $region17
    $region16: #{tpu_custom_call.1} parent=1 // pred_region
      %51 = dma.done [#allocation3], 128
    $region17: #{tpu_custom_call.1} parent=1 // pred_fallthru
      _
    // Predicated region
    $region18: #{tpu_custom_call.1} parent=1 // pred_check
      _
    $region19: #{tpu_custom_call.1} parent=1 // pred_check_branch
      %53 = sbr.rel (0) target = $region21
    $region20: #{tpu_custom_call.1} parent=1 // pred_region
      %55 = dma.done [#allocation6], 8192
    $region21: #{tpu_custom_call.1} parent=1 // pred_fallthru
      _
    // Predicated region
    $region22: #{tpu_custom_call.1} parent=1 // pred_check
      _
    $region23: #{tpu_custom_call.1} parent=1 // pred_check_branch
      %57 = sbr.rel (0) target = $region25
    $region24: #{tpu_custom_call.1} parent=1 // pred_region
      %59 = dma.done [#allocation6], 64
    $region25: #{tpu_custom_call.1} parent=1 // pred_fallthru
      _
    %v60 = vld [vmem:[#allocation2] sm:$0xff]
    %v61 = vld [vmem:[#allocation5] sm:$0xff]
    %v62 = vld [vmem:[#allocation5 + $0x8] sm:$0xff]
    %v63 = vld [vmem:[#allocation5 + $0x10] sm:$0xff]
    %v64 = vld [vmem:[#allocation5 + $0x18] sm:$0xff]
    %v65 = vld [vmem:[#allocation5 + $0x20] sm:$0xff]
    %v66 = vld [vmem:[#allocation5 + $0x28] sm:$0xff]
    %v67 = vld [vmem:[#allocation5 + $0x30] sm:$0xff]
    %v68 = vld [vmem:[#allocation5 + $0x38] sm:$0xff]
    %v69 = vld [vmem:[#allocation5 + $0x40] sm:$0xff]
    %v70 = vld [vmem:[#allocation5 + $0x48] sm:$0xff]
    %v71 = vld [vmem:[#allocation5 + $0x50] sm:$0xff]
    %v72 = vld [vmem:[#allocation5 + $0x58] sm:$0xff]
    %v73 = vld [vmem:[#allocation5 + $0x60] sm:$0xff]
    %v74 = vld [vmem:[#allocation5 + $0x68] sm:$0xff]
    %v75 = vld [vmem:[#allocation5 + $0x70] sm:$0xff]
    %v76 = vld [vmem:[#allocation5 + $0x78] sm:$0xff]
    %v77 = vld [vmem:[#allocation7] sm:$0x1]
    %v79 = vperm.slane %v77, 0
    %81 = vmatpush.msra.mxu0 %v76
    %82 = vmatpush.msra.mxu0 %v75
    %83 = vmatpush.msra.mxu0 %v74
    %84 = vmatpush.msra.mxu0 %v73
    %85 = vmatpush.msra.mxu0 %v72
    %86 = vmatpush.msra.mxu0 %v71
    %87 = vmatpush.msra.mxu0 %v70
    %88 = vmatpush.msra.mxu0 %v69
    %89 = vmatpush.msra.mxu0 %v68
    %90 = vmatpush.msra.mxu0 %v67
    %91 = vmatpush.msra.mxu0 %v66
    %92 = vmatpush.msra.mxu0 %v65
    %93 = vmatpush.msra.mxu0 %v64
    %94 = vmatpush.msra.mxu0 %v63
    %95 = vmatpush.msra.mxu0 %v62
    %96 = vmatpush.msra.mxu0 %v61
    %97 = vmatmul.f32.gmra.mxu0 %v60
    %v98 = vpop.f32.mrf.mxu0
    %v99 = vadd.f32 %v79, %v98
    %100 = vdwg.mxu0
    %v101 = vmax.f32 %v99, 0.0
    %s102 = scalar_lea.vmem [#allocation5], 128
    %v103 = vld [vmem:[%s102] sm:$0xff]
    %v104 = vld [vmem:[%s102 + $0x8] sm:$0xff]
    %v105 = vld [vmem:[%s102 + $0x10] sm:$0xff]
    %v106 = vld [vmem:[%s102 + $0x18] sm:$0xff]
    %v107 = vld [vmem:[%s102 + $0x20] sm:$0xff]
    %v108 = vld [vmem:[%s102 + $0x28] sm:$0xff]
    %v109 = vld [vmem:[%s102 + $0x30] sm:$0xff]
    %v110 = vld [vmem:[%s102 + $0x38] sm:$0xff]
    %v111 = vld [vmem:[%s102 + $0x40] sm:$0xff]
    %v112 = vld [vmem:[%s102 + $0x48] sm:$0xff]
    %v113 = vld [vmem:[%s102 + $0x50] sm:$0xff]
    %v114 = vld [vmem:[%s102 + $0x58] sm:$0xff]
    %v115 = vld [vmem:[%s102 + $0x60] sm:$0xff]
    %v116 = vld [vmem:[%s102 + $0x68] sm:$0xff]
    %v117 = vld [vmem:[%s102 + $0x70] sm:$0xff]
    %v118 = vld [vmem:[%s102 + $0x78] sm:$0xff]
    %s119 = scalar_lea.vmem [#allocation7], 1
    %v120 = vld [vmem:[%s119] sm:$0x1]
    %v122 = vperm.slane %v120, 0
    %124 = vmatpush.msra.mxu0 %v118
    %125 = vmatpush.msra.mxu0 %v117
    %126 = vmatpush.msra.mxu0 %v116
    %127 = vmatpush.msra.mxu0 %v115
    %128 = vmatpush.msra.mxu0 %v114
    %129 = vmatpush.msra.mxu0 %v113
    %130 = vmatpush.msra.mxu0 %v112
    %131 = vmatpush.msra.mxu0 %v111
    %132 = vmatpush.msra.mxu0 %v110
    %133 = vmatpush.msra.mxu0 %v109
    %134 = vmatpush.msra.mxu0 %v108
    %135 = vmatpush.msra.mxu0 %v107
    %136 = vmatpush.msra.mxu0 %v106
    %137 = vmatpush.msra.mxu0 %v105
    %138 = vmatpush.msra.mxu0 %v104
    %139 = vmatpush.msra.mxu0 %v103
    %140 = vmatmul.f32.gmra.mxu0 %v101
    %v141 = vpop.f32.mrf.mxu0
    %v142 = vadd.f32 %v122, %v141
    %143 = vdwg.mxu0
    %v144 = vmax.f32 %v142, 0.0
    %s145 = scalar_lea.vmem [#allocation5], 256
    %v146 = vld [vmem:[%s145] sm:$0xff]
    %v147 = vld [vmem:[%s145 + $0x8] sm:$0xff]
    %v148 = vld [vmem:[%s145 + $0x10] sm:$0xff]
    %v149 = vld [vmem:[%s145 + $0x18] sm:$0xff]
    %v150 = vld [vmem:[%s145 + $0x20] sm:$0xff]
    %v151 = vld [vmem:[%s145 + $0x28] sm:$0xff]
    %v152 = vld [vmem:[%s145 + $0x30] sm:$0xff]
    %v153 = vld [vmem:[%s145 + $0x38] sm:$0xff]
    %v154 = vld [vmem:[%s145 + $0x40] sm:$0xff]
    %v155 = vld [vmem:[%s145 + $0x48] sm:$0xff]
    %v156 = vld [vmem:[%s145 + $0x50] sm:$0xff]
    %v157 = vld [vmem:[%s145 + $0x58] sm:$0xff]
    %v158 = vld [vmem:[%s145 + $0x60] sm:$0xff]
    %v159 = vld [vmem:[%s145 + $0x68] sm:$0xff]
    %v160 = vld [vmem:[%s145 + $0x70] sm:$0xff]
    %v161 = vld [vmem:[%s145 + $0x78] sm:$0xff]
    %s162 = scalar_lea.vmem [#allocation7], 2
    %v163 = vld [vmem:[%s162] sm:$0x1]
    %v165 = vperm.slane %v163, 0
    %167 = vmatpush.msra.mxu0 %v161
    %168 = vmatpush.msra.mxu0 %v160
    %169 = vmatpush.msra.mxu0 %v159
    %170 = vmatpush.msra.mxu0 %v158
    %171 = vmatpush.msra.mxu0 %v157
    %172 = vmatpush.msra.mxu0 %v156
    %173 = vmatpush.msra.mxu0 %v155
    %174 = vmatpush.msra.mxu0 %v154
    %175 = vmatpush.msra.mxu0 %v153
    %176 = vmatpush.msra.mxu0 %v152
    %177 = vmatpush.msra.mxu0 %v151
    %178 = vmatpush.msra.mxu0 %v150
    %179 = vmatpush.msra.mxu0 %v149
    %180 = vmatpush.msra.mxu0 %v148
    %181 = vmatpush.msra.mxu0 %v147
    %182 = vmatpush.msra.mxu0 %v146
    %183 = vmatmul.f32.gmra.mxu0 %v144
    %v184 = vpop.f32.mrf.mxu0
    %v185 = vadd.f32 %v165, %v184
    %186 = vdwg.mxu0
    %v187 = vmax.f32 %v185, 0.0
    %s188 = scalar_lea.vmem [#allocation5], 384
    %v189 = vld [vmem:[%s188] sm:$0xff]
    %v190 = vld [vmem:[%s188 + $0x8] sm:$0xff]
    %v191 = vld [vmem:[%s188 + $0x10] sm:$0xff]
    %v192 = vld [vmem:[%s188 + $0x18] sm:$0xff]
    %v193 = vld [vmem:[%s188 + $0x20] sm:$0xff]
    %v194 = vld [vmem:[%s188 + $0x28] sm:$0xff]
    %v195 = vld [vmem:[%s188 + $0x30] sm:$0xff]
    %v196 = vld [vmem:[%s188 + $0x38] sm:$0xff]
    %v197 = vld [vmem:[%s188 + $0x40] sm:$0xff]
    %v198 = vld [vmem:[%s188 + $0x48] sm:$0xff]
    %v199 = vld [vmem:[%s188 + $0x50] sm:$0xff]
    %v200 = vld [vmem:[%s188 + $0x58] sm:$0xff]
    %v201 = vld [vmem:[%s188 + $0x60] sm:$0xff]
    %v202 = vld [vmem:[%s188 + $0x68] sm:$0xff]
    %v203 = vld [vmem:[%s188 + $0x70] sm:$0xff]
    %v204 = vld [vmem:[%s188 + $0x78] sm:$0xff]
    %s205 = scalar_lea.vmem [#allocation7], 3
    %v206 = vld [vmem:[%s205] sm:$0x1]
    %v208 = vperm.slane %v206, 0
    %210 = vmatpush.msra.mxu0 %v204
    %211 = vmatpush.msra.mxu0 %v203
    %212 = vmatpush.msra.mxu0 %v202
    %213 = vmatpush.msra.mxu0 %v201
    %214 = vmatpush.msra.mxu0 %v200
    %215 = vmatpush.msra.mxu0 %v199
    %216 = vmatpush.msra.mxu0 %v198
    %217 = vmatpush.msra.mxu0 %v197
    %218 = vmatpush.msra.mxu0 %v196
    %219 = vmatpush.msra.mxu0 %v195
    %220 = vmatpush.msra.mxu0 %v194
    %221 = vmatpush.msra.mxu0 %v193
    %222 = vmatpush.msra.mxu0 %v192
    %223 = vmatpush.msra.mxu0 %v191
    %224 = vmatpush.msra.mxu0 %v190
    %225 = vmatpush.msra.mxu0 %v189
    %226 = vmatmul.f32.gmra.mxu0 %v187
    %v227 = vpop.f32.mrf.mxu0
    %v228 = vadd.f32 %v208, %v227
    %229 = vdwg.mxu0
    %230 = vst [vmem:[#allocation8] sm:$0xff] %v228
    // Predicated region
    $region26: #{tpu_custom_call.1} parent=1 // pred_check
      _
    $region27: #{tpu_custom_call.1} parent=1 // pred_check_branch
      %232 = sbr.rel (0) target = $region29
    $region28: #{tpu_custom_call.1} parent=1 // pred_region
      %234 = vsyncadd [#allocation4], 0
      %s236 = sshll.u32 [#allocation8], 4
      %s237 = int_to_ptr.vmem [resolvable:$true] %s236
      %s238 = sshll.u32 %s3, 4
      %s239 = int_to_ptr.hbm [resolvable:$true] %s238
      %241 = dma.vmem_to_hbm [thread:$0]  %s237, 128, %s239, [#allocation4]
    $region29: #{tpu_custom_call.1} parent=1 // pred_fallthru
      _
    // Predicated region
    $region30: #{tpu_custom_call.1} parent=1 // pred_check
      _
    $region31: #{tpu_custom_call.1} parent=1 // pred_check_branch
      %243 = sbr.rel (0) target = $region33
    $region32: #{tpu_custom_call.1} parent=1 // pred_region
      %245 = dma.done [#allocation4], 128
    $region33: #{tpu_custom_call.1} parent=1 // pred_fallthru
      _
    %246 = vsyncpa [#allocation3], 1
    %247 = vsyncpa [#allocation6], 1
    %248 = vsyncpa [#allocation4], 1

</llo_original>
